<compile_context>
chip_gen: v7x
topology: tpu7x:2x2x1
jax: 0.10.0
libtpu: 0.0.40
codegen_flags: <defaults>
</compile_context>

<pallas_src>
import functools

import jax
import jax.numpy as jnp
from jax.experimental import pallas as pl
from jax.experimental.pallas import tpu as pltpu


def _neuronal_transformer_kernel(
    x_ref,        # [tm, H]   input hidden-state rows (f32)
    w_emb_ref,    # [H, H]    embedding_transformation weight (bf16, [in,out])
    b_emb_ref,    # [1, H]    f32
    w_n_ref,      # [H, H]    hidden -> neuronal-state weight (bf16)
    u_n_ref,      # [H, H]    state  -> neuronal-state weight (bf16)
    b_n_ref,      # [1, H]    f32
    w_o_ref,      # [H, H]    state -> hidden weight (bf16)
    b_o_ref,      # [1, H]    f32
    gamma_ref,    # [1, H]    LayerNorm weight (f32)
    beta_ref,     # [1, H]    LayerNorm bias  (f32)
    out_ref,      # [tm, H]
    *,
    num_iterations: int,
    eps: float,
):
    bf16 = jnp.bfloat16
    f32 = jnp.float32

    # Whole-block reads, hoisted out of the unrolled iteration loop.  The
    # weights stay VMEM-resident; the compiler streams them through vregs
    # per matmul.
    w_emb = w_emb_ref[...]
    w_n = w_n_ref[...]
    u_n = u_n_ref[...]
    w_o = w_o_ref[...]
    b_emb = b_emb_ref[...]
    b_n = b_n_ref[...]
    b_o = b_o_ref[...]

    # --- embedding_transformation (Linear) ---------------------------------
    h = jnp.dot(x_ref[...].astype(bf16), w_emb,
                preferred_element_type=f32) + b_emb

    # --- first NeuronalLayer call (no previous neuronal_states) ------------
    n = jnp.tanh(jnp.dot(h.astype(bf16), w_n, preferred_element_type=f32)
                 + b_n)
    n_bf = n.astype(bf16)
    h = jnp.dot(n_bf, w_o, preferred_element_type=f32) + b_o

    # --- remaining (num_iterations - 1) NeuronalLayer calls -----------------
    # Two matmuls into one f32 accumulator (no [tm, 2H] concat); each value
    # is cast to bf16 exactly once.  num_iterations is a small static int, so
    # static unroll is fine (switch to lax.fori_loop(..., unroll=True)
    # carrying (h, n_bf) if it grows beyond ~4 to bound vreg live ranges).
    for _ in range(num_iterations - 1):
        pre = jnp.dot(h.astype(bf16), w_n, preferred_element_type=f32)
        pre = pre + jnp.dot(n_bf, u_n, preferred_element_type=f32)
        n = jnp.tanh(pre + b_n)
        n_bf = n.astype(bf16)
        h = jnp.dot(n_bf, w_o, preferred_element_type=f32) + b_o

    # --- LayerNorm over the hidden dimension (f32 throughout) ---------------
    # Note: zero-padded rows (only the <8 sublane-fill rows) have var=0 and
    # come out as beta; they are finite and sliced away by the wrapper.
    mean = jnp.mean(h, axis=-1, keepdims=True)
    centered = h - mean
    var = jnp.mean(centered * centered, axis=-1, keepdims=True)
    normed = centered * jax.lax.rsqrt(var + eps)
    out_ref[...] = (normed * gamma_ref[...] + beta_ref[...]).astype(out_ref.dtype)


def _default_compiler_config():
    """Generation-aware (tm, vmem_limit_bytes) defaults."""
    try:
        vmem_cap = pltpu.get_tpu_info().vmem_capacity_bytes
    except Exception:  # pragma: no cover - conservative fallback
        vmem_cap = 128 * 1024 * 1024
    if vmem_cap <= 64 * 1024 * 1024:
        # v7x: 64 MiB VMEM per TensorCore -> keep a 48 MiB scoped budget and
        # moderate row tiles.
        return 256, 48 * 1024 * 1024
    # v5e / v6e: 128 MiB VMEM.  tm=512 halves grid-step overhead and doubles
    # weight reuse on v6e; on v5e 128-256 already saturates the 4x128^2 MXU,
    # so callers there may pass a smaller tm explicitly.
    return 512, 96 * 1024 * 1024


def _choose_tm(M, target_tm):
    """Pick a row tile that (a) is a multiple of 8 sublanes, (b) divides the
    minimally padded row count (so no full-array pad/slice HBM copies are
    needed), and (c) leaves >=2 grid steps for v7x megacore sharding."""
    m8 = -(-M // 8) * 8                       # minimal sublane pad (<8 rows)
    target = max(8, min(-(-target_tm // 8) * 8, m8))
    tm = 8
    for cand in range(target, 7, -8):
        if m8 % cand == 0:
            tm = cand
            break
    if m8 // tm < 2 and m8 >= 16:
        half = max(8, (m8 // 2 // 8) * 8)
        for cand in range(half, 7, -8):
            if m8 % cand == 0:
                tm = cand
                break
    return m8, tm


def prepare_params(params):
    """One-time parameter prep: bf16 MXU weights, f32 biases/LayerNorm.

    Call once at load time so no per-forward casts / concats hit HBM."""
    bf16 = jnp.bfloat16
    return {
        "w_emb": params["w_emb"].astype(bf16),
        "b_emb": params["b_emb"].astype(jnp.float32),
        "w_n": params["w_n"].astype(bf16),
        "u_n": params["u_n"].astype(bf16),
        "b_n": params["b_n"].astype(jnp.float32),
        "w_o": params["w_o"].astype(bf16),
        "b_o": params["b_o"].astype(jnp.float32),
        "gamma": params["gamma"].astype(jnp.float32),
        "beta": params["beta"].astype(jnp.float32),
    }


def neuronal_transformer_forward(hidden_states, kparams, *, num_iterations,
                                 eps, tm=None, vmem_limit_bytes=None):
    """hidden_states: [B, S, H] float32.  kparams: output of prepare_params.

    Returns [B, S, H] float32."""
    B, S, H = hidden_states.shape
    M = B * S
    x2 = hidden_states.reshape(M, H)

    default_tm, default_vmem = _default_compiler_config()
    if tm is None:
        tm = default_tm
    if vmem_limit_bytes is None:
        vmem_limit_bytes = default_vmem

    m8, tm = _choose_tm(M, tm)
    if m8 != M:
        # Only the sublane remainder (<8 rows) is ever padded.
        x2 = jnp.pad(x2, ((0, m8 - M), (0, 0)))
    grid = (m8 // tm,)

    kernel = functools.partial(
        _neuronal_transformer_kernel, num_iterations=num_iterations, eps=eps
    )

    row_spec = pl.BlockSpec((tm, H), lambda i: (i, 0))

    def resident(shape, single_buffer=False):
        # Same block index at every grid step -> stays VMEM-resident.  The
        # big [H,H] weights are single-buffered (their block never changes),
        # freeing VMEM for larger row tiles on v7x.
        if single_buffer:
            return pl.BlockSpec(shape, lambda i: (0, 0),
                                pipeline_mode=pl.Buffered(1))
        return pl.BlockSpec(shape, lambda i: (0, 0))

    out = pl.pallas_call(
        kernel,
        out_shape=jax.ShapeDtypeStruct((m8, H), hidden_states.dtype),
        grid=grid,
        in_specs=[
            row_spec,
            resident((H, H), True), resident((1, H)),   # w_emb, b_emb
            resident((H, H), True),                     # w_n
            resident((H, H), True), resident((1, H)),   # u_n,  b_n
            resident((H, H), True), resident((1, H)),   # w_o,  b_o
            resident((1, H)), resident((1, H)),         # gamma, beta
        ],
        out_specs=row_spec,
        compiler_params=pltpu.CompilerParams(
            dimension_semantics=("parallel",),          # megacore on v7x
            vmem_limit_bytes=vmem_limit_bytes,
        ),
    )(
        x2,
        kparams["w_emb"], kparams["b_emb"],
        kparams["w_n"], kparams["u_n"], kparams["b_n"],
        kparams["w_o"], kparams["b_o"],
        kparams["gamma"], kparams["beta"],
    )
    if m8 != M:
        out = out[:M]
    return out.reshape(B, S, H)


def init_params(key, hidden_size):
    """Deterministic synthetic parameter init (matches module's shapes)."""
    ks = jax.random.split(key, 9)
    H = hidden_size
    scale = 1.0 / jnp.sqrt(jnp.float32(H))
    return {
        # embedding_transformation: nn.Linear(H, H) stored as [in, out]
        "w_emb": jax.random.normal(ks[0], (H, H), jnp.float32) * scale,
        "b_emb": jax.random.normal(ks[1], (1, H), jnp.float32) * 0.1,
        # NeuronalLayer stand-in parameters
        "w_n": jax.random.normal(ks[2], (H, H), jnp.float32) * scale,
        "u_n": jax.random.normal(ks[3], (H, H), jnp.float32) * scale,
        "b_n": jax.random.normal(ks[4], (1, H), jnp.float32) * 0.1,
        "w_o": jax.random.normal(ks[5], (H, H), jnp.float32) * scale,
        "b_o": jax.random.normal(ks[6], (1, H), jnp.float32) * 0.1,
        # nn.LayerNorm(H)
        "gamma": 1.0 + jax.random.normal(ks[7], (1, H), jnp.float32) * 0.1,
        "beta": jax.random.normal(ks[8], (1, H), jnp.float32) * 0.1,
    }


def _reference(hidden_states, params, *, num_iterations, eps):
    """Pure-JAX reference with the same bf16-operand / f32-accum recipe."""
    bf16 = jnp.bfloat16
    dot = lambda a, b: jnp.dot(a.astype(bf16), b.astype(bf16),
                               preferred_element_type=jnp.float32)
    h = dot(hidden_states, params["w_emb"]) + params["b_emb"]
    n = jnp.tanh(dot(h, params["w_n"]) + params["b_n"])
    h = dot(n, params["w_o"]) + params["b_o"]
    for _ in range(num_iterations - 1):
        n = jnp.tanh(dot(h, params["w_n"]) + dot(n, params["u_n"])
                     + params["b_n"])
        h = dot(n, params["w_o"]) + params["b_o"]
    mean = jnp.mean(h, axis=-1, keepdims=True)
    c = h - mean
    var = jnp.mean(c * c, axis=-1, keepdims=True)
    return (c * jax.lax.rsqrt(var + eps)) * params["gamma"] + params["beta"]


if __name__ == "__main__":
    # Small shapes consistent with the module's forward: [batch, seq, hidden].
    B, S, H = 2, 8, 128
    NUM_ITERATIONS = 3          # neuron_config.num_iterations
    LAYER_NORM_EPS = 1e-12      # roberta_config.layer_norm_eps

    key = jax.random.PRNGKey(0)
    k_x, k_p = jax.random.split(key)
    hidden_states = jax.random.normal(k_x, (B, S, H), jnp.float32)
    raw_params = init_params(k_p, H)
    kparams = prepare_params(raw_params)   # one-time bf16 weight prep

    # tm=8 exercises the multi-step row grid at this toy size; production
    # shapes get generation-aware defaults (256 on v7x, 512 on v5e/v6e).
    out = neuronal_transformer_forward(
        hidden_states, kparams,
        num_iterations=NUM_ITERATIONS, eps=LAYER_NORM_EPS, tm=8,
    )
    jax.block_until_ready(out)

    assert out.shape == (B, S, H) and out.dtype == jnp.float32
    ref = _reference(hidden_states, raw_params,
                     num_iterations=NUM_ITERATIONS, eps=LAYER_NORM_EPS)
    max_err = float(jnp.max(jnp.abs(out - ref)))
    assert jnp.all(jnp.isfinite(out)) and max_err < 5e-2, f"mismatch {max_err}"
    print("KERNEL_OK")
</pallas_src>

<mosaic_0001>
module attributes {stable_mosaic.version = 11 : i64} {
  func.func @_neuronal_transformer_kernel(%arg0: i32, %arg1: memref<8x128xf32, #tpu.memory_space<vmem>>, %arg2: memref<128x128xbf16, #tpu.memory_space<vmem>>, %arg3: memref<1x128xf32, #tpu.memory_space<vmem>>, %arg4: memref<128x128xbf16, #tpu.memory_space<vmem>>, %arg5: memref<128x128xbf16, #tpu.memory_space<vmem>>, %arg6: memref<1x128xf32, #tpu.memory_space<vmem>>, %arg7: memref<128x128xbf16, #tpu.memory_space<vmem>>, %arg8: memref<1x128xf32, #tpu.memory_space<vmem>>, %arg9: memref<1x128xf32, #tpu.memory_space<vmem>>, %arg10: memref<1x128xf32, #tpu.memory_space<vmem>>, %arg11: memref<8x128xf32, #tpu.memory_space<vmem>>) attributes {dimension_semantics = [#tpu.dimension_semantics<parallel>], iteration_bounds = array<i64: 2>, scalar_prefetch = 0 : i64, scratch_operands = 0 : i64, tpu.core_type = #tpu.core_type<tc>, window_params = [{transform_indices = @transform_0, window_bounds = array<i64: 8, 128>}, {pipeline_mode = #tpu.pipeline_mode<synchronous>, transform_indices = @transform_1, window_bounds = array<i64: 128, 128>}, {pipeline_mode = #tpu.pipeline_mode<synchronous>, transform_indices = @transform_2, window_bounds = array<i64: 1, 128>}, {pipeline_mode = #tpu.pipeline_mode<synchronous>, transform_indices = @transform_3, window_bounds = array<i64: 128, 128>}, {pipeline_mode = #tpu.pipeline_mode<synchronous>, transform_indices = @transform_4, window_bounds = array<i64: 128, 128>}, {pipeline_mode = #tpu.pipeline_mode<synchronous>, transform_indices = @transform_5, window_bounds = array<i64: 1, 128>}, {pipeline_mode = #tpu.pipeline_mode<synchronous>, transform_indices = @transform_6, window_bounds = array<i64: 128, 128>}, {pipeline_mode = #tpu.pipeline_mode<synchronous>, transform_indices = @transform_7, window_bounds = array<i64: 1, 128>}, {pipeline_mode = #tpu.pipeline_mode<synchronous>, transform_indices = @transform_8, window_bounds = array<i64: 1, 128>}, {pipeline_mode = #tpu.pipeline_mode<synchronous>, transform_indices = @transform_9, window_bounds = array<i64: 1, 128>}, {transform_indices = @transform_10, window_bounds = array<i64: 8, 128>}]} {
    %c0 = arith.constant 0 : index
    %c0_0 = arith.constant 0 : index
    %0 = vector.load %arg2[%c0, %c0_0] : memref<128x128xbf16, #tpu.memory_space<vmem>>, vector<128x128xbf16>
    %c0_1 = arith.constant 0 : index
    %c0_2 = arith.constant 0 : index
    %1 = vector.load %arg4[%c0_1, %c0_2] : memref<128x128xbf16, #tpu.memory_space<vmem>>, vector<128x128xbf16>
    %c0_3 = arith.constant 0 : index
    %c0_4 = arith.constant 0 : index
    %2 = vector.load %arg5[%c0_3, %c0_4] : memref<128x128xbf16, #tpu.memory_space<vmem>>, vector<128x128xbf16>
    %c0_5 = arith.constant 0 : index
    %c0_6 = arith.constant 0 : index
    %3 = vector.load %arg7[%c0_5, %c0_6] : memref<128x128xbf16, #tpu.memory_space<vmem>>, vector<128x128xbf16>
    %c0_7 = arith.constant 0 : index
    %c0_8 = arith.constant 0 : index
    %4 = vector.load %arg3[%c0_7, %c0_8] : memref<1x128xf32, #tpu.memory_space<vmem>>, vector<1x128xf32>
    %c0_9 = arith.constant 0 : index
    %c0_10 = arith.constant 0 : index
    %5 = vector.load %arg6[%c0_9, %c0_10] : memref<1x128xf32, #tpu.memory_space<vmem>>, vector<1x128xf32>
    %c0_11 = arith.constant 0 : index
    %c0_12 = arith.constant 0 : index
    %6 = vector.load %arg8[%c0_11, %c0_12] : memref<1x128xf32, #tpu.memory_space<vmem>>, vector<1x128xf32>
    %c0_13 = arith.constant 0 : index
    %c0_14 = arith.constant 0 : index
    %7 = vector.load %arg1[%c0_13, %c0_14] : memref<8x128xf32, #tpu.memory_space<vmem>>, vector<8x128xf32>
    %8 = arith.truncf %7 : vector<8x128xf32> to vector<8x128xbf16>
    %cst = arith.constant dense<0.000000e+00> : vector<8x128xf32>
    %9 = tpu.matmul %8, %0, %cst {dimension_numbers = #tpu.dot_dimension_numbers<[1], [0], [0], [1], [0, 0, 1, 1], [], []>} : vector<8x128xbf16>, vector<128x128xbf16>, vector<8x128xf32> -> vector<8x128xf32>
    %10 = vector.broadcast %4 : vector<1x128xf32> to vector<8x128xf32>
    %11 = arith.addf %9, %10 : vector<8x128xf32>
    %12 = arith.truncf %11 : vector<8x128xf32> to vector<8x128xbf16>
    %cst_15 = arith.constant dense<0.000000e+00> : vector<8x128xf32>
    %13 = tpu.matmul %12, %1, %cst_15 {dimension_numbers = #tpu.dot_dimension_numbers<[1], [0], [0], [1], [0, 0, 1, 1], [], []>} : vector<8x128xbf16>, vector<128x128xbf16>, vector<8x128xf32> -> vector<8x128xf32>
    %14 = vector.broadcast %5 : vector<1x128xf32> to vector<8x128xf32>
    %15 = arith.addf %13, %14 : vector<8x128xf32>
    %16 = math.tanh %15 : vector<8x128xf32>
    %17 = arith.truncf %16 : vector<8x128xf32> to vector<8x128xbf16>
    %cst_16 = arith.constant dense<0.000000e+00> : vector<8x128xf32>
    %18 = tpu.matmul %17, %3, %cst_16 {dimension_numbers = #tpu.dot_dimension_numbers<[1], [0], [0], [1], [0, 0, 1, 1], [], []>} : vector<8x128xbf16>, vector<128x128xbf16>, vector<8x128xf32> -> vector<8x128xf32>
    %19 = vector.broadcast %6 : vector<1x128xf32> to vector<8x128xf32>
    %20 = arith.addf %18, %19 : vector<8x128xf32>
    %21 = arith.truncf %20 : vector<8x128xf32> to vector<8x128xbf16>
    %cst_17 = arith.constant dense<0.000000e+00> : vector<8x128xf32>
    %22 = tpu.matmul %21, %1, %cst_17 {dimension_numbers = #tpu.dot_dimension_numbers<[1], [0], [0], [1], [0, 0, 1, 1], [], []>} : vector<8x128xbf16>, vector<128x128xbf16>, vector<8x128xf32> -> vector<8x128xf32>
    %cst_18 = arith.constant dense<0.000000e+00> : vector<8x128xf32>
    %23 = tpu.matmul %17, %2, %cst_18 {dimension_numbers = #tpu.dot_dimension_numbers<[1], [0], [0], [1], [0, 0, 1, 1], [], []>} : vector<8x128xbf16>, vector<128x128xbf16>, vector<8x128xf32> -> vector<8x128xf32>
    %24 = arith.addf %22, %23 : vector<8x128xf32>
    %25 = vector.broadcast %5 : vector<1x128xf32> to vector<8x128xf32>
    %26 = arith.addf %24, %25 : vector<8x128xf32>
    %27 = math.tanh %26 : vector<8x128xf32>
    %28 = arith.truncf %27 : vector<8x128xf32> to vector<8x128xbf16>
    %cst_19 = arith.constant dense<0.000000e+00> : vector<8x128xf32>
    %29 = tpu.matmul %28, %3, %cst_19 {dimension_numbers = #tpu.dot_dimension_numbers<[1], [0], [0], [1], [0, 0, 1, 1], [], []>} : vector<8x128xbf16>, vector<128x128xbf16>, vector<8x128xf32> -> vector<8x128xf32>
    %30 = vector.broadcast %6 : vector<1x128xf32> to vector<8x128xf32>
    %31 = arith.addf %29, %30 : vector<8x128xf32>
    %32 = arith.truncf %31 : vector<8x128xf32> to vector<8x128xbf16>
    %cst_20 = arith.constant dense<0.000000e+00> : vector<8x128xf32>
    %33 = tpu.matmul %32, %1, %cst_20 {dimension_numbers = #tpu.dot_dimension_numbers<[1], [0], [0], [1], [0, 0, 1, 1], [], []>} : vector<8x128xbf16>, vector<128x128xbf16>, vector<8x128xf32> -> vector<8x128xf32>
    %cst_21 = arith.constant dense<0.000000e+00> : vector<8x128xf32>
    %34 = tpu.matmul %28, %2, %cst_21 {dimension_numbers = #tpu.dot_dimension_numbers<[1], [0], [0], [1], [0, 0, 1, 1], [], []>} : vector<8x128xbf16>, vector<128x128xbf16>, vector<8x128xf32> -> vector<8x128xf32>
    %35 = arith.addf %33, %34 : vector<8x128xf32>
    %36 = vector.broadcast %5 : vector<1x128xf32> to vector<8x128xf32>
    %37 = arith.addf %35, %36 : vector<8x128xf32>
    %38 = math.tanh %37 : vector<8x128xf32>
    %39 = arith.truncf %38 : vector<8x128xf32> to vector<8x128xbf16>
    %cst_22 = arith.constant dense<0.000000e+00> : vector<8x128xf32>
    %40 = tpu.matmul %39, %3, %cst_22 {dimension_numbers = #tpu.dot_dimension_numbers<[1], [0], [0], [1], [0, 0, 1, 1], [], []>} : vector<8x128xbf16>, vector<128x128xbf16>, vector<8x128xf32> -> vector<8x128xf32>
    %41 = vector.broadcast %6 : vector<1x128xf32> to vector<8x128xf32>
    %42 = arith.addf %40, %41 : vector<8x128xf32>
    %cst_23 = arith.constant dense<0.000000e+00> : vector<8xf32>
    %43 = vector.multi_reduction <add>, %42, %cst_23 [1] : vector<8x128xf32> to vector<8xf32>
    %44 = vector.shape_cast %43 : vector<8xf32> to vector<8x1xf32>
    %cst_24 = arith.constant 1.280000e+02 : f32
    %45 = vector.broadcast %cst_24 : f32 to vector<8x1xf32>
    %46 = arith.divf %44, %45 : vector<8x1xf32>
    %47 = vector.broadcast %46 : vector<8x1xf32> to vector<8x128xf32>
    %48 = arith.subf %42, %47 : vector<8x128xf32>
    %49 = arith.mulf %48, %48 : vector<8x128xf32>
    %cst_25 = arith.constant dense<0.000000e+00> : vector<8xf32>
    %50 = vector.multi_reduction <add>, %49, %cst_25 [1] : vector<8x128xf32> to vector<8xf32>
    %51 = vector.shape_cast %50 : vector<8xf32> to vector<8x1xf32>
    %cst_26 = arith.constant 1.280000e+02 : f32
    %52 = vector.broadcast %cst_26 : f32 to vector<8x1xf32>
    %53 = arith.divf %51, %52 : vector<8x1xf32>
    %cst_27 = arith.constant 9.99999996E-13 : f32
    %54 = vector.broadcast %cst_27 : f32 to vector<8x1xf32>
    %55 = arith.addf %53, %54 : vector<8x1xf32>
    %56 = math.rsqrt %55 : vector<8x1xf32>
    %57 = vector.broadcast %56 : vector<8x1xf32> to vector<8x128xf32>
    %58 = arith.mulf %48, %57 : vector<8x128xf32>
    %c0_28 = arith.constant 0 : index
    %c0_29 = arith.constant 0 : index
    %59 = vector.load %arg9[%c0_28, %c0_29] : memref<1x128xf32, #tpu.memory_space<vmem>>, vector<1x128xf32>
    %60 = vector.broadcast %59 : vector<1x128xf32> to vector<8x128xf32>
    %61 = arith.mulf %58, %60 : vector<8x128xf32>
    %c0_30 = arith.constant 0 : index
    %c0_31 = arith.constant 0 : index
    %62 = vector.load %arg10[%c0_30, %c0_31] : memref<1x128xf32, #tpu.memory_space<vmem>>, vector<1x128xf32>
    %63 = vector.broadcast %62 : vector<1x128xf32> to vector<8x128xf32>
    %64 = arith.addf %61, %63 : vector<8x128xf32>
    %c0_32 = arith.constant 0 : index
    %c0_33 = arith.constant 0 : index
    %65 = vector.load %arg11[%c0_32, %c0_33] : memref<8x128xf32, #tpu.memory_space<vmem>>, vector<8x128xf32>
    tpu.vector_store %arg11[%c0_32, %c0_33], %64 {strides = array<i32>} : memref<8x128xf32, #tpu.memory_space<vmem>>, vector<8x128xf32>,
    return
  }
  func.func @transform_0(%arg0: i32) -> (i32, i32) {
    %c0_i32 = arith.constant 0 : i32
    %c0_i32_0 = arith.constant 0 : i32
    return %arg0, %c0_i32 : i32, i32
  }
  func.func @transform_1(%arg0: i32) -> (i32, i32) {
    %c0_i32 = arith.constant 0 : i32
    %c0_i32_0 = arith.constant 0 : i32
    %c0_i32_1 = arith.constant 0 : i32
    return %c0_i32, %c0_i32_0 : i32, i32
  }
  func.func @transform_2(%arg0: i32) -> (i32, i32) {
    %c0_i32 = arith.constant 0 : i32
    %c0_i32_0 = arith.constant 0 : i32
    %c0_i32_1 = arith.constant 0 : i32
    return %c0_i32, %c0_i32_0 : i32, i32
  }
  func.func @transform_3(%arg0: i32) -> (i32, i32) {
    %c0_i32 = arith.constant 0 : i32
    %c0_i32_0 = arith.constant 0 : i32
    %c0_i32_1 = arith.constant 0 : i32
    return %c0_i32, %c0_i32_0 : i32, i32
  }
  func.func @transform_4(%arg0: i32) -> (i32, i32) {
    %c0_i32 = arith.constant 0 : i32
    %c0_i32_0 = arith.constant 0 : i32
    %c0_i32_1 = arith.constant 0 : i32
    return %c0_i32, %c0_i32_0 : i32, i32
  }
  func.func @transform_5(%arg0: i32) -> (i32, i32) {
    %c0_i32 = arith.constant 0 : i32
    %c0_i32_0 = arith.constant 0 : i32
    %c0_i32_1 = arith.constant 0 : i32
    return %c0_i32, %c0_i32_0 : i32, i32
  }
  func.func @transform_6(%arg0: i32) -> (i32, i32) {
    %c0_i32 = arith.constant 0 : i32
    %c0_i32_0 = arith.constant 0 : i32
    %c0_i32_1 = arith.constant 0 : i32
    return %c0_i32, %c0_i32_0 : i32, i32
  }
  func.func @transform_7(%arg0: i32) -> (i32, i32) {
    %c0_i32 = arith.constant 0 : i32
    %c0_i32_0 = arith.constant 0 : i32
    %c0_i32_1 = arith.constant 0 : i32
    return %c0_i32, %c0_i32_0 : i32, i32
  }
  func.func @transform_8(%arg0: i32) -> (i32, i32) {
    %c0_i32 = arith.constant 0 : i32
    %c0_i32_0 = arith.constant 0 : i32
    %c0_i32_1 = arith.constant 0 : i32
    return %c0_i32, %c0_i32_0 : i32, i32
  }
  func.func @transform_9(%arg0: i32) -> (i32, i32) {
    %c0_i32 = arith.constant 0 : i32
    %c0_i32_0 = arith.constant 0 : i32
    %c0_i32_1 = arith.constant 0 : i32
    return %c0_i32, %c0_i32_0 : i32, i32
  }
  func.func @transform_10(%arg0: i32) -> (i32, i32) {
    %c0_i32 = arith.constant 0 : i32
    %c0_i32_0 = arith.constant 0 : i32
    return %arg0, %c0_i32 : i32, i32
  }
}

</mosaic_0001>

<llo_original>
// kernel: tpu_custom_call.1
$region0: #{tpu_custom_call.1}
  #allocation0 [shape = 'u32[]', space=smem, size = 0x4, offset = 0x4, fixed_abs, tag = 'smem constant byte address 0x4 - core index']
  #allocation1 [shape = 'u32[144,128]{1,0:T(1,128)}', space=vmem, size = 0x12000, scoped, tag = 'internal scratch']
  %s0 = inlined_call_operand.hbm [shape: f32[16,128], index: 0, kind: input, shape index: {}]
  %s1 = inlined_call_operand.hbm [shape: bf16[128,128], index: 1, kind: input, shape index: {}]
  %s2 = inlined_call_operand.hbm [shape: f32[1,128], index: 2, kind: input, shape index: {}]
  %s3 = inlined_call_operand.hbm [shape: bf16[128,128], index: 3, kind: input, shape index: {}]
  %s4 = inlined_call_operand.hbm [shape: bf16[128,128], index: 4, kind: input, shape index: {}]
  %s5 = inlined_call_operand.hbm [shape: f32[1,128], index: 5, kind: input, shape index: {}]
  %s6 = inlined_call_operand.hbm [shape: bf16[128,128], index: 6, kind: input, shape index: {}]
  %s7 = inlined_call_operand.hbm [shape: f32[1,128], index: 7, kind: input, shape index: {}]
  %s8 = inlined_call_operand.hbm [shape: f32[1,128], index: 8, kind: input, shape index: {}]
  %s9 = inlined_call_operand.hbm [shape: f32[1,128], index: 9, kind: input, shape index: {}]
  %s10 = inlined_call_operand.hbm [shape: f32[16,128], index: 10, kind: output, shape index: {}]
  %s11 = sld [smem:[#allocation0]]
  $region113: #{tpu_custom_call.1} parent=0
    _
  %s13 = ssub.s32 1, %s11
  %s14 = scalar_select 0, %s13, %s11
  $region1: #{tpu_custom_call.1} parent=0
    #allocation2 [shape = 'u8[8192]{0}', space=vmem, size = 0x2000, scoped, tag = 'input window, operand 0']
    #allocation3 [shape = 's32[2]{0}', space=sflag, size = 0x8, scoped, tag = 'scoped memory for tpu_custom_call.1']
    #allocation4 [shape = 's32[2]{0}', space=sflag, size = 0x8, scoped, tag = 'scoped memory for tpu_custom_call.1']
    #allocation5 [shape = 'u8[32768]{0}', space=vmem, size = 0x8000, scoped, tag = 'input window, operand 1, single buffered']
    #allocation6 [shape = 's32[1]{0}', space=sflag, size = 0x4, scoped, tag = 'scoped memory for tpu_custom_call.1']
    #allocation7 [shape = 'u8[512]{0}', space=vmem, size = 0x400, scoped, tag = 'input window, operand 2, single buffered']
    #allocation8 [shape = 'u8[32768]{0}', space=vmem, size = 0x8000, scoped, tag = 'input window, operand 3, single buffered']
    #allocation9 [shape = 's32[1]{0}', space=sflag, size = 0x4, scoped, tag = 'scoped memory for tpu_custom_call.1']
    #allocation10 [shape = 'u8[32768]{0}', space=vmem, size = 0x8000, scoped, tag = 'input window, operand 4, single buffered']
    #allocation11 [shape = 'u8[512]{0}', space=vmem, size = 0x400, scoped, tag = 'input window, operand 5, single buffered']
    #allocation12 [shape = 's32[1]{0}', space=sflag, size = 0x4, scoped, tag = 'scoped memory for tpu_custom_call.1']
    #allocation13 [shape = 'u8[32768]{0}', space=vmem, size = 0x8000, scoped, tag = 'input window, operand 6, single buffered']
    #allocation14 [shape = 'u8[512]{0}', space=vmem, size = 0x400, scoped, tag = 'input window, operand 7, single buffered']
    #allocation15 [shape = 's32[1]{0}', space=sflag, size = 0x4, scoped, tag = 'scoped memory for tpu_custom_call.1']
    #allocation16 [shape = 'u8[512]{0}', space=vmem, size = 0x400, scoped, tag = 'input window, operand 8, single buffered']
    #allocation17 [shape = 'u8[512]{0}', space=vmem, size = 0x400, scoped, tag = 'input window, operand 9, single buffered']
    #allocation18 [shape = 's32[1]{0}', space=sflag, size = 0x4, scoped, tag = 'scoped memory for tpu_custom_call.1']
    #allocation19 [shape = 'u8[8192]{0}', space=vmem, size = 0x2000, scoped, tag = 'output window, operand 0']
    %15 = vsyncpa [#allocation3], 0
    %s16 = scalar_lea.sflag [#allocation3], 1
    %17 = vsyncpa %s16, 0
    %18 = vsyncpa [#allocation6], 0
    %19 = vsyncpa [#allocation9], 0
    %20 = vsyncpa [#allocation12], 0
    %21 = vsyncpa [#allocation15], 0
    %22 = vsyncpa [#allocation18], 0
    %23 = vsyncpa [#allocation4], 0
    %s24 = scalar_lea.sflag [#allocation4], 1
    %25 = vsyncpa %s24, 0
    loop: start=0, step=1, limit=4
    $region2: #{tpu_custom_call.1} parent=1 // loop_pre_header
      _
    $region3: #{tpu_custom_call.1} parent=1 // loop_header
      %s27 = sphi 0, %s31
      %p28 = scmp.ge.s32.totalorder %s27, 4
      %s37 = sphi 0, %s39
      %s40 = sphi 0, %s37
      %s41 = sphi 0, %s40
      %s57 = sphi 0, %s41
      %s61 = sphi 0, %s61
      %s63 = sphi 0, %s61
      %s64 = sphi 0, %s63
      %s78 = sphi 0, %s64
      %s82 = sphi 0, %s82
      %s84 = sphi 0, %s82
      %s85 = sphi 0, %s84
      %s99 = sphi 0, %s85
      %s103 = sphi 0, %s103
      %s105 = sphi 0, %s103
      %s106 = sphi 0, %s105
      %s120 = sphi 0, %s106
      %s124 = sphi 0, %s124
      %s126 = sphi 0, %s124
      %s127 = sphi 0, %s126
      %s141 = sphi 0, %s127
      %s145 = sphi 0, %s145
      %s147 = sphi 0, %s145
      %s148 = sphi 0, %s147
      %s162 = sphi 0, %s148
      %s166 = sphi 0, %s166
      %s168 = sphi 0, %s166
      %s169 = sphi 0, %s168
      %s183 = sphi 0, %s169
      %s187 = sphi 0, %s187
      %s189 = sphi 0, %s187
      %s190 = sphi 0, %s189
      %s204 = sphi 0, %s190
      %s208 = sphi 0, %s208
      %s210 = sphi 0, %s208
      %s211 = sphi 0, %s210
      %s225 = sphi 0, %s211
      %s229 = sphi 0, %s229
      %s231 = sphi 0, %s229
      %s232 = sphi 0, %s231
      %s246 = sphi 0, %s232
      %s252 = sphi 0, %s254
      %s255 = sphi 0, %s252
      %s256 = sphi 0, %s255
      %s272 = sphi 0, %s256
    $region4: #{tpu_custom_call.1} parent=1 // loop_header_branch
      %30 = sbr.rel (%p28) target = $region8
    $region5: #{tpu_custom_call.1} parent=1 // loop_body
      %s32 = ssub.s32 %s27, 1
      %s33 = ssub.s32 %s27, 2
      %s34 = sadd.s32 %s27, 1
      %s35 = ssub.s32 %s27, %s34
      %p36 = scmp.eq.s32.totalorder %s35, 0
      %s38 = sadd.s32 %s37, 1
      %s39 = scalar_select %p36, %s37, %s38
      %p42 = pneg %p36
      %p43 = scmp.eq.s32.totalorder %s27, 1
      %p44 = por %p42, %p43
      %p45 = scmp.ne.s32.totalorder %s37, %s40
      %p46 = scmp.eq.s32.totalorder %s27, 0
      %p47 = por %p45, %p46
      %p48 = scmp.ne.s32.totalorder %s37, %s40
      %p49 = scmp.eq.s32.totalorder %s32, 1
      %p50 = por %p48, %p49
      %p51 = scmp.ne.s32.totalorder %s40, %s41
      %p52 = scmp.eq.s32.totalorder %s32, 0
      %p53 = por %p51, %p52
      %p54 = scmp.ne.s32.totalorder %s40, %s41
      %p55 = scmp.eq.s32.totalorder %s33, 1
      %p56 = por %p54, %p55
      %p58 = scmp.ne.s32.totalorder %s41, %s57
      %p59 = scmp.eq.s32.totalorder %s33, 0
      %p60 = por %p58, %p59
      %s62 = sadd.s32 %s61, 1
      %p65 = scmp.eq.s32.totalorder %s27, 1
      %p66 = scmp.ne.s32.totalorder %s61, %s63
      %p67 = scmp.eq.s32.totalorder %s27, 0
      %p68 = por %p66, %p67
      %p69 = scmp.ne.s32.totalorder %s61, %s63
      %p70 = scmp.eq.s32.totalorder %s32, 1
      %p71 = por %p69, %p70
      %p72 = scmp.ne.s32.totalorder %s63, %s64
      %p73 = scmp.eq.s32.totalorder %s32, 0
      %p74 = por %p72, %p73
      %p75 = scmp.ne.s32.totalorder %s63, %s64
      %p76 = scmp.eq.s32.totalorder %s33, 1
      %p77 = por %p75, %p76
      %p79 = scmp.ne.s32.totalorder %s64, %s78
      %p80 = scmp.eq.s32.totalorder %s33, 0
      %p81 = por %p79, %p80
      %s83 = sadd.s32 %s82, 1
      %p86 = scmp.eq.s32.totalorder %s27, 1
      %p87 = scmp.ne.s32.totalorder %s82, %s84
      %p88 = scmp.eq.s32.totalorder %s27, 0
      %p89 = por %p87, %p88
      %p90 = scmp.ne.s32.totalorder %s82, %s84
      %p91 = scmp.eq.s32.totalorder %s32, 1
      %p92 = por %p90, %p91
      %p93 = scmp.ne.s32.totalorder %s84, %s85
      %p94 = scmp.eq.s32.totalorder %s32, 0
      %p95 = por %p93, %p94
      %p96 = scmp.ne.s32.totalorder %s84, %s85
      %p97 = scmp.eq.s32.totalorder %s33, 1
      %p98 = por %p96, %p97
      %p100 = scmp.ne.s32.totalorder %s85, %s99
      %p101 = scmp.eq.s32.totalorder %s33, 0
      %p102 = por %p100, %p101
      %s104 = sadd.s32 %s103, 1
      %p107 = scmp.eq.s32.totalorder %s27, 1
      %p108 = scmp.ne.s32.totalorder %s103, %s105
      %p109 = scmp.eq.s32.totalorder %s27, 0
      %p110 = por %p108, %p109
      %p111 = scmp.ne.s32.totalorder %s103, %s105
      %p112 = scmp.eq.s32.totalorder %s32, 1
      %p113 = por %p111, %p112
      %p114 = scmp.ne.s32.totalorder %s105, %s106
      %p115 = scmp.eq.s32.totalorder %s32, 0
      %p116 = por %p114, %p115
      %p117 = scmp.ne.s32.totalorder %s105, %s106
      %p118 = scmp.eq.s32.totalorder %s33, 1
      %p119 = por %p117, %p118
      %p121 = scmp.ne.s32.totalorder %s106, %s120
      %p122 = scmp.eq.s32.totalorder %s33, 0
      %p123 = por %p121, %p122
      %s125 = sadd.s32 %s124, 1
      %p128 = scmp.eq.s32.totalorder %s27, 1
      %p129 = scmp.ne.s32.totalorder %s124, %s126
      %p130 = scmp.eq.s32.totalorder %s27, 0
      %p131 = por %p129, %p130
      %p132 = scmp.ne.s32.totalorder %s124, %s126
      %p133 = scmp.eq.s32.totalorder %s32, 1
      %p134 = por %p132, %p133
      %p135 = scmp.ne.s32.totalorder %s126, %s127
      %p136 = scmp.eq.s32.totalorder %s32, 0
      %p137 = por %p135, %p136
      %p138 = scmp.ne.s32.totalorder %s126, %s127
      %p139 = scmp.eq.s32.totalorder %s33, 1
      %p140 = por %p138, %p139
      %p142 = scmp.ne.s32.totalorder %s127, %s141
      %p143 = scmp.eq.s32.totalorder %s33, 0
      %p144 = por %p142, %p143
      %s146 = sadd.s32 %s145, 1
      %p149 = scmp.eq.s32.totalorder %s27, 1
      %p150 = scmp.ne.s32.totalorder %s145, %s147
      %p151 = scmp.eq.s32.totalorder %s27, 0
      %p152 = por %p150, %p151
      %p153 = scmp.ne.s32.totalorder %s145, %s147
      %p154 = scmp.eq.s32.totalorder %s32, 1
      %p155 = por %p153, %p154
      %p156 = scmp.ne.s32.totalorder %s147, %s148
      %p157 = scmp.eq.s32.totalorder %s32, 0
      %p158 = por %p156, %p157
      %p159 = scmp.ne.s32.totalorder %s147, %s148
      %p160 = scmp.eq.s32.totalorder %s33, 1
      %p161 = por %p159, %p160
      %p163 = scmp.ne.s32.totalorder %s148, %s162
      %p164 = scmp.eq.s32.totalorder %s33, 0
      %p165 = por %p163, %p164
      %s167 = sadd.s32 %s166, 1
      %p170 = scmp.eq.s32.totalorder %s27, 1
      %p171 = scmp.ne.s32.totalorder %s166, %s168
      %p172 = scmp.eq.s32.totalorder %s27, 0
      %p173 = por %p171, %p172
      %p174 = scmp.ne.s32.totalorder %s166, %s168
      %p175 = scmp.eq.s32.totalorder %s32, 1
      %p176 = por %p174, %p175
      %p177 = scmp.ne.s32.totalorder %s168, %s169
      %p178 = scmp.eq.s32.totalorder %s32, 0
      %p179 = por %p177, %p178
      %p180 = scmp.ne.s32.totalorder %s168, %s169
      %p181 = scmp.eq.s32.totalorder %s33, 1
      %p182 = por %p180, %p181
      %p184 = scmp.ne.s32.totalorder %s169, %s183
      %p185 = scmp.eq.s32.totalorder %s33, 0
      %p186 = por %p184, %p185
      %s188 = sadd.s32 %s187, 1
      %p191 = scmp.eq.s32.totalorder %s27, 1
      %p192 = scmp.ne.s32.totalorder %s187, %s189
      %p193 = scmp.eq.s32.totalorder %s27, 0
      %p194 = por %p192, %p193
      %p195 = scmp.ne.s32.totalorder %s187, %s189
      %p196 = scmp.eq.s32.totalorder %s32, 1
      %p197 = por %p195, %p196
      %p198 = scmp.ne.s32.totalorder %s189, %s190
      %p199 = scmp.eq.s32.totalorder %s32, 0
      %p200 = por %p198, %p199
      %p201 = scmp.ne.s32.totalorder %s189, %s190
      %p202 = scmp.eq.s32.totalorder %s33, 1
      %p203 = por %p201, %p202
      %p205 = scmp.ne.s32.totalorder %s190, %s204
      %p206 = scmp.eq.s32.totalorder %s33, 0
      %p207 = por %p205, %p206
      %s209 = sadd.s32 %s208, 1
      %p212 = scmp.eq.s32.totalorder %s27, 1
      %p213 = scmp.ne.s32.totalorder %s208, %s210
      %p214 = scmp.eq.s32.totalorder %s27, 0
      %p215 = por %p213, %p214
      %p216 = scmp.ne.s32.totalorder %s208, %s210
      %p217 = scmp.eq.s32.totalorder %s32, 1
      %p218 = por %p216, %p217
      %p219 = scmp.ne.s32.totalorder %s210, %s211
      %p220 = scmp.eq.s32.totalorder %s32, 0
      %p221 = por %p219, %p220
      %p222 = scmp.ne.s32.totalorder %s210, %s211
      %p223 = scmp.eq.s32.totalorder %s33, 1
      %p224 = por %p222, %p223
      %p226 = scmp.ne.s32.totalorder %s211, %s225
      %p227 = scmp.eq.s32.totalorder %s33, 0
      %p228 = por %p226, %p227
      %s230 = sadd.s32 %s229, 1
      %p233 = scmp.eq.s32.totalorder %s27, 1
      %p234 = scmp.ne.s32.totalorder %s229, %s231
      %p235 = scmp.eq.s32.totalorder %s27, 0
      %p236 = por %p234, %p235
      %p237 = scmp.ne.s32.totalorder %s229, %s231
      %p238 = scmp.eq.s32.totalorder %s32, 1
      %p239 = por %p237, %p238
      %p240 = scmp.ne.s32.totalorder %s231, %s232
      %p241 = scmp.eq.s32.totalorder %s32, 0
      %p242 = por %p240, %p241
      %p243 = scmp.ne.s32.totalorder %s231, %s232
      %p244 = scmp.eq.s32.totalorder %s33, 1
      %p245 = por %p243, %p244
      %p247 = scmp.ne.s32.totalorder %s232, %s246
      %p248 = scmp.eq.s32.totalorder %s33, 0
      %p249 = por %p247, %p248
      %s250 = ssub.s32 %s27, %s34
      %p251 = scmp.eq.s32.totalorder %s250, 0
      %s253 = sadd.s32 %s252, 1
      %s254 = scalar_select %p251, %s252, %s253
      %p257 = pneg %p251
      %p258 = scmp.eq.s32.totalorder %s27, 1
      %p259 = por %p257, %p258
      %p260 = scmp.ne.s32.totalorder %s252, %s255
      %p261 = scmp.eq.s32.totalorder %s27, 0
      %p262 = por %p260, %p261
      %p263 = scmp.ne.s32.totalorder %s252, %s255
      %p264 = scmp.eq.s32.totalorder %s32, 1
      %p265 = por %p263, %p264
      %p266 = scmp.ne.s32.totalorder %s255, %s256
      %p267 = scmp.eq.s32.totalorder %s32, 0
      %p268 = por %p266, %p267
      %p269 = scmp.ne.s32.totalorder %s255, %s256
      %p270 = scmp.eq.s32.totalorder %s33, 1
      %p271 = por %p269, %p270
      %p273 = scmp.ne.s32.totalorder %s256, %s272
      %p274 = scmp.eq.s32.totalorder %s33, 0
      %p275 = por %p273, %p274
      %p276 = scmp.le.s32.totalorder 1, %s27
      %p277 = scmp.lt.s32.totalorder %s27, 3
      %p278 = pnand %p276, %p277
      %p279 = pneg %p278
      // Predicated region
      $region9: #{tpu_custom_call.1} parent=5 // pred_check
        _
      $region10: #{tpu_custom_call.1} parent=5 // pred_check_branch
        %281 = sbr.rel (%p278) target = $region12
      $region11: #{tpu_custom_call.1} parent=5 // pred_region
        %s282 = ssub.s32 %s27, 1
        // Predicated region
        $region13: #{tpu_custom_call.1} parent=11 // pred_check
          %p283 = pneg %p74
        $region14: #{tpu_custom_call.1} parent=11 // pred_check_branch
          %285 = sbr.rel (%p283) target = $region16
        $region15: #{tpu_custom_call.1} parent=11 // pred_region
          %s287 = ssub.s32 1024, 1024
          %288 = vsyncadd [#allocation6], %s287
          %s289 = sshll.u32 [#allocation5], 4
          %s290 = int_to_ptr.vmem [resolvable:$true] %s289
          %295 = dma.hbm_to_vmem [thread:$0]  %s1, 1024, %s290, [#allocation6], 64, 64, 4
        $region16: #{tpu_custom_call.1} parent=11 // pred_fallthru
          _
        // Predicated region
        $region17: #{tpu_custom_call.1} parent=11 // pred_check
          %p296 = pneg %p95
        $region18: #{tpu_custom_call.1} parent=11 // pred_check_branch
          %298 = sbr.rel (%p296) target = $region20
        $region19: #{tpu_custom_call.1} parent=11 // pred_region
          %s300 = ssub.s32 16, 16
          %301 = vsyncadd [#allocation6], %s300
          %s303 = sshll.u32 [#allocation7], 4
          %s304 = int_to_ptr.vmem [resolvable:$true] %s303
          %306 = dma.hbm_to_vmem [thread:$0]  %s2, 16, %s304, [#allocation6]
        $region20: #{tpu_custom_call.1} parent=11 // pred_fallthru
          _
        // Predicated region
        $region21: #{tpu_custom_call.1} parent=11 // pred_check
          %p307 = pneg %p116
        $region22: #{tpu_custom_call.1} parent=11 // pred_check_branch
          %309 = sbr.rel (%p307) target = $region24
        $region23: #{tpu_custom_call.1} parent=11 // pred_region
          %s311 = ssub.s32 1024, 1024
          %312 = vsyncadd [#allocation9], %s311
          %s313 = sshll.u32 [#allocation8], 4
          %s314 = int_to_ptr.vmem [resolvable:$true] %s313
          %319 = dma.hbm_to_vmem [thread:$0]  %s3, 1024, %s314, [#allocation9], 64, 64, 4
        $region24: #{tpu_custom_call.1} parent=11 // pred_fallthru
          _
        // Predicated region
        $region25: #{tpu_custom_call.1} parent=11 // pred_check
          %p320 = pneg %p137
        $region26: #{tpu_custom_call.1} parent=11 // pred_check_branch
          %322 = sbr.rel (%p320) target = $region28
        $region27: #{tpu_custom_call.1} parent=11 // pred_region
          %s324 = ssub.s32 1024, 1024
          %325 = vsyncadd [#allocation9], %s324
          %s326 = sshll.u32 [#allocation10], 4
          %s327 = int_to_ptr.vmem [resolvable:$true] %s326
          %332 = dma.hbm_to_vmem [thread:$0]  %s4, 1024, %s327, [#allocation9], 64, 64, 4
        $region28: #{tpu_custom_call.1} parent=11 // pred_fallthru
          _
        // Predicated region
        $region29: #{tpu_custom_call.1} parent=11 // pred_check
          %p333 = pneg %p158
        $region30: #{tpu_custom_call.1} parent=11 // pred_check_branch
          %335 = sbr.rel (%p333) target = $region32
        $region31: #{tpu_custom_call.1} parent=11 // pred_region
          %s337 = ssub.s32 16, 16
          %338 = vsyncadd [#allocation12], %s337
          %s340 = sshll.u32 [#allocation11], 4
          %s341 = int_to_ptr.vmem [resolvable:$true] %s340
          %343 = dma.hbm_to_vmem [thread:$0]  %s5, 16, %s341, [#allocation12]
        $region32: #{tpu_custom_call.1} parent=11 // pred_fallthru
          _
        // Predicated region
        $region33: #{tpu_custom_call.1} parent=11 // pred_check
          %p344 = pneg %p179
        $region34: #{tpu_custom_call.1} parent=11 // pred_check_branch
          %346 = sbr.rel (%p344) target = $region36
        $region35: #{tpu_custom_call.1} parent=11 // pred_region
          %s348 = ssub.s32 1024, 1024
          %349 = vsyncadd [#allocation12], %s348
          %s350 = sshll.u32 [#allocation13], 4
          %s351 = int_to_ptr.vmem [resolvable:$true] %s350
          %356 = dma.hbm_to_vmem [thread:$0]  %s6, 1024, %s351, [#allocation12], 64, 64, 4
        $region36: #{tpu_custom_call.1} parent=11 // pred_fallthru
          _
        // Predicated region
        $region37: #{tpu_custom_call.1} parent=11 // pred_check
          %p357 = pneg %p200
        $region38: #{tpu_custom_call.1} parent=11 // pred_check_branch
          %359 = sbr.rel (%p357) target = $region40
        $region39: #{tpu_custom_call.1} parent=11 // pred_region
          %s361 = ssub.s32 16, 16
          %362 = vsyncadd [#allocation15], %s361
          %s364 = sshll.u32 [#allocation14], 4
          %s365 = int_to_ptr.vmem [resolvable:$true] %s364
          %367 = dma.hbm_to_vmem [thread:$0]  %s7, 16, %s365, [#allocation15]
        $region40: #{tpu_custom_call.1} parent=11 // pred_fallthru
          _
        // Predicated region
        $region41: #{tpu_custom_call.1} parent=11 // pred_check
          %p368 = pneg %p221
        $region42: #{tpu_custom_call.1} parent=11 // pred_check_branch
          %370 = sbr.rel (%p368) target = $region44
        $region43: #{tpu_custom_call.1} parent=11 // pred_region
          %s372 = ssub.s32 16, 16
          %373 = vsyncadd [#allocation15], %s372
          %s375 = sshll.u32 [#allocation16], 4
          %s376 = int_to_ptr.vmem [resolvable:$true] %s375
          %378 = dma.hbm_to_vmem [thread:$0]  %s8, 16, %s376, [#allocation15]
        $region44: #{tpu_custom_call.1} parent=11 // pred_fallthru
          _
        // Predicated region
        $region45: #{tpu_custom_call.1} parent=11 // pred_check
          %p379 = pneg %p242
        $region46: #{tpu_custom_call.1} parent=11 // pred_check_branch
          %381 = sbr.rel (%p379) target = $region48
        $region47: #{tpu_custom_call.1} parent=11 // pred_region
          %s383 = ssub.s32 16, 16
          %384 = vsyncadd [#allocation18], %s383
          %s386 = sshll.u32 [#allocation17], 4
          %s387 = int_to_ptr.vmem [resolvable:$true] %s386
          %389 = dma.hbm_to_vmem [thread:$0]  %s9, 16, %s387, [#allocation18]
        $region48: #{tpu_custom_call.1} parent=11 // pred_fallthru
          _
      $region12: #{tpu_custom_call.1} parent=5 // pred_fallthru
        _
      %p390 = scmp.lt.s32.totalorder %s27, 2
      // Predicated region
      $region49: #{tpu_custom_call.1} parent=5 // pred_check
        %p391 = pneg %p390
      $region50: #{tpu_custom_call.1} parent=5 // pred_check_branch
        %393 = sbr.rel (%p391) target = $region52
      $region51: #{tpu_custom_call.1} parent=5 // pred_region
        // Predicated region
        $region53: #{tpu_custom_call.1} parent=51 // pred_check
          %p394 = pneg %p47
        $region54: #{tpu_custom_call.1} parent=51 // pred_check_branch
          %396 = sbr.rel (%p394) target = $region56
        $region55: #{tpu_custom_call.1} parent=51 // pred_region
          %s397 = sand.u32 %s37, 1
          %s398 = scalar_lea.sflag [#allocation3], %s397
          %s399 = sand.u32 %s37, 1
          %s400 = smul.addr %s399, 8
          %s401 = scalar_lea.vmem [#allocation2], %s400
          %s403 = ssub.s32 128, 128
          %404 = vsyncadd %s398, %s403
          %s405 = smul.addr %s27, 128
          %s406 = scalar_lea.hbm %s0, %s405
          %s408 = sshll.u32 %s401, 4
          %s409 = int_to_ptr.vmem [resolvable:$true] %s408
          %411 = dma.hbm_to_vmem [thread:$0]  %s406, 128, %s409, %s398
        $region56: #{tpu_custom_call.1} parent=51 // pred_fallthru
          _
      $region52: #{tpu_custom_call.1} parent=5 // pred_fallthru
        _
      %p412 = scmp.le.s32.totalorder 1, %s27
      %p413 = scmp.lt.s32.totalorder %s27, 3
      %p414 = pnand %p412, %p413
      %p415 = pneg %p414
      // Predicated region
      $region57: #{tpu_custom_call.1} parent=5 // pred_check
        _
      $region58: #{tpu_custom_call.1} parent=5 // pred_check_branch
        %417 = sbr.rel (%p414) target = $region60
      $region59: #{tpu_custom_call.1} parent=5 // pred_region
        %s418 = ssub.s32 %s27, 1
        %s419 = sand.u32 %s40, 1
        %s420 = scalar_lea.sflag [#allocation3], %s419
        %s421 = sand.u32 %s40, 1
        %s422 = smul.addr %s421, 8
        %s423 = scalar_lea.vmem [#allocation2], %s422
        // Predicated region
        $region61: #{tpu_custom_call.1} parent=59 // pred_check
          %p424 = pneg %p53
        $region62: #{tpu_custom_call.1} parent=59 // pred_check_branch
          %426 = sbr.rel (%p424) target = $region64
        $region63: #{tpu_custom_call.1} parent=59 // pred_region
          %427 = dma.done %s420, 128
        $region64: #{tpu_custom_call.1} parent=59 // pred_fallthru
          _
        // Predicated region
        $region65: #{tpu_custom_call.1} parent=59 // pred_check
          %p428 = pneg %p74
        $region66: #{tpu_custom_call.1} parent=59 // pred_check_branch
          %430 = sbr.rel (%p428) target = $region68
        $region67: #{tpu_custom_call.1} parent=59 // pred_region
          %431 = dma.done [#allocation6], 1024
        $region68: #{tpu_custom_call.1} parent=59 // pred_fallthru
          _
        // Predicated region
        $region69: #{tpu_custom_call.1} parent=59 // pred_check
          %p432 = pneg %p95
        $region70: #{tpu_custom_call.1} parent=59 // pred_check_branch
          %434 = sbr.rel (%p432) target = $region72
        $region71: #{tpu_custom_call.1} parent=59 // pred_region
          %435 = dma.done [#allocation6], 16
        $region72: #{tpu_custom_call.1} parent=59 // pred_fallthru
          _
        // Predicated region
        $region73: #{tpu_custom_call.1} parent=59 // pred_check
          %p436 = pneg %p116
        $region74: #{tpu_custom_call.1} parent=59 // pred_check_branch
          %438 = sbr.rel (%p436) target = $region76
        $region75: #{tpu_custom_call.1} parent=59 // pred_region
          %439 = dma.done [#allocation9], 1024
        $region76: #{tpu_custom_call.1} parent=59 // pred_fallthru
          _
        // Predicated region
        $region77: #{tpu_custom_call.1} parent=59 // pred_check
          %p440 = pneg %p137
        $region78: #{tpu_custom_call.1} parent=59 // pred_check_branch
          %442 = sbr.rel (%p440) target = $region80
        $region79: #{tpu_custom_call.1} parent=59 // pred_region
          %443 = dma.done [#allocation9], 1024
        $region80: #{tpu_custom_call.1} parent=59 // pred_fallthru
          _
        // Predicated region
        $region81: #{tpu_custom_call.1} parent=59 // pred_check
          %p444 = pneg %p158
        $region82: #{tpu_custom_call.1} parent=59 // pred_check_branch
          %446 = sbr.rel (%p444) target = $region84
        $region83: #{tpu_custom_call.1} parent=59 // pred_region
          %447 = dma.done [#allocation12], 16
        $region84: #{tpu_custom_call.1} parent=59 // pred_fallthru
          _
        // Predicated region
        $region85: #{tpu_custom_call.1} parent=59 // pred_check
          %p448 = pneg %p179
        $region86: #{tpu_custom_call.1} parent=59 // pred_check_branch
          %450 = sbr.rel (%p448) target = $region88
        $region87: #{tpu_custom_call.1} parent=59 // pred_region
          %451 = dma.done [#allocation12], 1024
        $region88: #{tpu_custom_call.1} parent=59 // pred_fallthru
          _
        // Predicated region
        $region89: #{tpu_custom_call.1} parent=59 // pred_check
          %p452 = pneg %p200
        $region90: #{tpu_custom_call.1} parent=59 // pred_check_branch
          %454 = sbr.rel (%p452) target = $region92
        $region91: #{tpu_custom_call.1} parent=59 // pred_region
          %455 = dma.done [#allocation15], 16
        $region92: #{tpu_custom_call.1} parent=59 // pred_fallthru
          _
        // Predicated region
        $region93: #{tpu_custom_call.1} parent=59 // pred_check
          %p456 = pneg %p221
        $region94: #{tpu_custom_call.1} parent=59 // pred_check_branch
          %458 = sbr.rel (%p456) target = $region96
        $region95: #{tpu_custom_call.1} parent=59 // pred_region
          %459 = dma.done [#allocation15], 16
        $region96: #{tpu_custom_call.1} parent=59 // pred_fallthru
          _
        // Predicated region
        $region97: #{tpu_custom_call.1} parent=59 // pred_check
          %p460 = pneg %p242
        $region98: #{tpu_custom_call.1} parent=59 // pred_check_branch
          %462 = sbr.rel (%p460) target = $region100
        $region99: #{tpu_custom_call.1} parent=59 // pred_region
          %463 = dma.done [#allocation18], 16
        $region100: #{tpu_custom_call.1} parent=59 // pred_fallthru
          _
        %s464 = sand.u32 %s40, 1
        %s465 = scalar_lea.sflag [#allocation3], %s464
        %s466 = sand.u32 %s40, 1
        %s467 = smul.addr %s466, 8
        %s468 = scalar_lea.vmem [#allocation2], %s467
        %p469 = pneg %p53
        %p470 = pneg %p50
        %p471 = pneg %p74
        %p472 = pneg %p71
        %p473 = pneg %p95
        %p474 = pneg %p92
        %p475 = pneg %p116
        %p476 = pneg %p113
        %p477 = pneg %p137
        %p478 = pneg %p134
        %p479 = pneg %p158
        %p480 = pneg %p155
        %p481 = pneg %p179
        %p482 = pneg %p176
        %p483 = pneg %p200
        %p484 = pneg %p197
        %p485 = pneg %p221
        %p486 = pneg %p218
        %p487 = pneg %p242
        %p488 = pneg %p239
        %p489 = pneg %p268
        %p490 = pneg %p265
        %s491 = sand.u32 %s255, 1
        %s492 = scalar_lea.sflag [#allocation4], %s491
        %s493 = sand.u32 %s255, 1
        %s494 = smul.addr %s493, 8
        %s495 = scalar_lea.vmem [#allocation19], %s494
        %v497 = vld [vmem:[#allocation5] sm:$0xf]
        %v498 = vld [vmem:[#allocation5 + $0x4] sm:$0xf]
        %v499 = vld [vmem:[#allocation5 + $0x8] sm:$0xf]
        %v500 = vld [vmem:[#allocation5 + $0xc] sm:$0xf]
        %v501 = vld [vmem:[#allocation5 + $0x10] sm:$0xf]
        %v502 = vld [vmem:[#allocation5 + $0x14] sm:$0xf]
        %v503 = vld [vmem:[#allocation5 + $0x18] sm:$0xf]
        %v504 = vld [vmem:[#allocation5 + $0x1c] sm:$0xf]
        %v505 = vld [vmem:[#allocation5 + $0x20] sm:$0xf]
        %v506 = vld [vmem:[#allocation5 + $0x24] sm:$0xf]
        %v507 = vld [vmem:[#allocation5 + $0x28] sm:$0xf]
        %v508 = vld [vmem:[#allocation5 + $0x2c] sm:$0xf]
        %v509 = vld [vmem:[#allocation5 + $0x30] sm:$0xf]
        %v510 = vld [vmem:[#allocation5 + $0x34] sm:$0xf]
        %v511 = vld [vmem:[#allocation5 + $0x38] sm:$0xf]
        %v512 = vld [vmem:[#allocation5 + $0x3c] sm:$0xf]
        %v513 = vld [vmem:[#allocation8] sm:$0xf]
        %v514 = vld [vmem:[#allocation8 + $0x4] sm:$0xf]
        %v515 = vld [vmem:[#allocation8 + $0x8] sm:$0xf]
        %v516 = vld [vmem:[#allocation8 + $0xc] sm:$0xf]
        %v517 = vld [vmem:[#allocation8 + $0x10] sm:$0xf]
        %v518 = vld [vmem:[#allocation8 + $0x14] sm:$0xf]
        %v519 = vld [vmem:[#allocation8 + $0x18] sm:$0xf]
        %v520 = vld [vmem:[#allocation8 + $0x1c] sm:$0xf]
        %v521 = vld [vmem:[#allocation8 + $0x20] sm:$0xf]
        %v522 = vld [vmem:[#allocation8 + $0x24] sm:$0xf]
        %v523 = vld [vmem:[#allocation8 + $0x28] sm:$0xf]
        %v524 = vld [vmem:[#allocation8 + $0x2c] sm:$0xf]
        %v525 = vld [vmem:[#allocation8 + $0x30] sm:$0xf]
        %v526 = vld [vmem:[#allocation8 + $0x34] sm:$0xf]
        %v527 = vld [vmem:[#allocation8 + $0x38] sm:$0xf]
        %v528 = vld [vmem:[#allocation8 + $0x3c] sm:$0xf]
        %v529 = vld [vmem:[#allocation10] sm:$0xf]
        %v530 = vld [vmem:[#allocation10 + $0x4] sm:$0xf]
        %v531 = vld [vmem:[#allocation10 + $0x8] sm:$0xf]
        %v532 = vld [vmem:[#allocation10 + $0xc] sm:$0xf]
        %v533 = vld [vmem:[#allocation10 + $0x10] sm:$0xf]
        %v534 = vld [vmem:[#allocation10 + $0x14] sm:$0xf]
        %v535 = vld [vmem:[#allocation10 + $0x18] sm:$0xf]
        %v536 = vld [vmem:[#allocation10 + $0x1c] sm:$0xf]
        %v537 = vld [vmem:[#allocation10 + $0x20] sm:$0xf]
        %v538 = vld [vmem:[#allocation10 + $0x24] sm:$0xf]
        %v539 = vld [vmem:[#allocation10 + $0x28] sm:$0xf]
        %v540 = vld [vmem:[#allocation10 + $0x2c] sm:$0xf]
        %v541 = vld [vmem:[#allocation10 + $0x30] sm:$0xf]
        %v542 = vld [vmem:[#allocation10 + $0x34] sm:$0xf]
        %v543 = vld [vmem:[#allocation10 + $0x38] sm:$0xf]
        %v544 = vld [vmem:[#allocation10 + $0x3c] sm:$0xf]
        %v545 = vld [vmem:[#allocation13] sm:$0xf]
        %v546 = vld [vmem:[#allocation13 + $0x4] sm:$0xf]
        %v547 = vld [vmem:[#allocation13 + $0x8] sm:$0xf]
        %v548 = vld [vmem:[#allocation13 + $0xc] sm:$0xf]
        %v549 = vld [vmem:[#allocation13 + $0x10] sm:$0xf]
        %v550 = vld [vmem:[#allocation13 + $0x14] sm:$0xf]
        %v551 = vld [vmem:[#allocation13 + $0x18] sm:$0xf]
        %v552 = vld [vmem:[#allocation13 + $0x1c] sm:$0xf]
        %v553 = vld [vmem:[#allocation13 + $0x20] sm:$0xf]
        %v554 = vld [vmem:[#allocation13 + $0x24] sm:$0xf]
        %v555 = vld [vmem:[#allocation13 + $0x28] sm:$0xf]
        %v556 = vld [vmem:[#allocation13 + $0x2c] sm:$0xf]
        %v557 = vld [vmem:[#allocation13 + $0x30] sm:$0xf]
        %v558 = vld [vmem:[#allocation13 + $0x34] sm:$0xf]
        %v559 = vld [vmem:[#allocation13 + $0x38] sm:$0xf]
        %v560 = vld [vmem:[#allocation13 + $0x3c] sm:$0xf]
        %v561 = vld [vmem:[#allocation7] sm:$0x1]
        %v562 = vld [vmem:[#allocation11] sm:$0x1]
        %v563 = vld [vmem:[#allocation14] sm:$0x1]
        %v564 = vld [vmem:[%s423] sm:$0xff]
        %v565 = vpack.c.bf16 %v564, %v564
        %v567 = vlaneseq
        %v568 = vshrl.u32 %v567, 7
        %v569 = vsub.s32 0, %v568
        %v570 = vrot.slane %v561, %v569
        %v588 = vunpack.c.l.b16 %v497
        %v589 = vunpack.c.l.b16 %v498
        %v590 = vunpack.c.l.b16 %v499
        %v591 = vunpack.c.l.b16 %v500
        %v592 = vunpack.c.l.b16 %v501
        %v593 = vunpack.c.l.b16 %v502
        %v594 = vunpack.c.l.b16 %v503
        %v595 = vunpack.c.l.b16 %v504
        %v596 = vunpack.c.l.b16 %v505
        %v597 = vunpack.c.l.b16 %v506
        %v598 = vunpack.c.l.b16 %v507
        %v599 = vunpack.c.l.b16 %v508
        %v600 = vunpack.c.l.b16 %v509
        %v601 = vunpack.c.l.b16 %v510
        %v602 = vunpack.c.l.b16 %v511
        %v603 = vunpack.c.l.b16 %v512
        %v604 = vpack.c.b16 %v589, %v588
        %v605 = vpack.c.b16 %v591, %v590
        %v606 = vpack.c.b16 %v593, %v592
        %v607 = vpack.c.b16 %v595, %v594
        %v608 = vpack.c.b16 %v597, %v596
        %v609 = vpack.c.b16 %v599, %v598
        %v610 = vpack.c.b16 %v601, %v600
        %v611 = vpack.c.b16 %v603, %v602
        %620 = vmatprep.subr.bf16.mxu0 0
        %621 = vmatpush1.bf16.msra.mxu0 %v604
        %622 = vmatprep.subr.bf16.mxu0 0
        %623 = vmatpush1.bf16.msra.mxu0 %v605
        %624 = vmatprep.subr.bf16.mxu0 0
        %625 = vmatpush1.bf16.msra.mxu0 %v606
        %626 = vmatprep.subr.bf16.mxu0 0
        %627 = vmatpush1.bf16.msra.mxu0 %v607
        %628 = vmatprep.subr.bf16.mxu0 0
        %629 = vmatpush1.bf16.msra.mxu0 %v608
        %630 = vmatprep.subr.bf16.mxu0 0
        %631 = vmatpush1.bf16.msra.mxu0 %v609
        %632 = vmatprep.subr.bf16.mxu0 0
        %633 = vmatpush1.bf16.msra.mxu0 %v610
        %634 = vmatprep.subr.bf16.mxu0 0
        %635 = vmatpush1.bf16.msra.mxu0 %v611
        %636 = vmatprep.subr.bf16.mxu0 0
        %637 = vmatpush1.bf16.msra.mxu0 0
        %638 = vmatprep.subr.bf16.mxu0 0
        %639 = vmatpush1.bf16.msra.mxu0 0
        %640 = vmatprep.subr.bf16.mxu0 0
        %641 = vmatpush1.bf16.msra.mxu0 0
        %642 = vmatprep.subr.bf16.mxu0 0
        %643 = vmatpush1.bf16.msra.mxu0 0
        %644 = vmatprep.subr.bf16.mxu0 0
        %645 = vmatpush1.bf16.msra.mxu0 0
        %646 = vmatprep.subr.bf16.mxu0 0
        %647 = vmatpush1.bf16.msra.mxu0 0
        %648 = vmatprep.subr.bf16.mxu0 0
        %649 = vmatpush1.bf16.msra.mxu0 0
        %650 = vmatprep.subr.bf16.mxu0 0
        %651 = vmatpush1.bf16.msra.mxu0 0
        %652 = vmatprep.mubr.bf16.mxu0 0
        %653 = vmatmul.mubr.bf16.gmra.mrb[0].mxu0 %v565
        %v654 = vpop.f32.mrb[0].mxu0
        %v655 = vadd.f32 %v570, %v654
        %v656 = vpop.f32.mrb[0].mxu0
        %v657 = vpop.f32.mrb[0].mxu0
        %v658 = vpop.f32.mrb[0].mxu0
        %659 = vdwg.mxu0
        %v660 = vpack.c.bf16 %v655, %v655
        %v662 = vlaneseq
        %v663 = vshrl.u32 %v662, 7
        %v664 = vsub.s32 0, %v663
        %v665 = vrot.slane %v562, %v664
        %v683 = vunpack.c.l.b16 %v513
        %v684 = vunpack.c.l.b16 %v514
        %v685 = vunpack.c.l.b16 %v515
        %v686 = vunpack.c.l.b16 %v516
        %v687 = vunpack.c.l.b16 %v517
        %v688 = vunpack.c.l.b16 %v518
        %v689 = vunpack.c.l.b16 %v519
        %v690 = vunpack.c.l.b16 %v520
        %v691 = vunpack.c.l.b16 %v521
        %v692 = vunpack.c.l.b16 %v522
        %v693 = vunpack.c.l.b16 %v523
        %v694 = vunpack.c.l.b16 %v524
        %v695 = vunpack.c.l.b16 %v525
        %v696 = vunpack.c.l.b16 %v526
        %v697 = vunpack.c.l.b16 %v527
        %v698 = vunpack.c.l.b16 %v528
        %v699 = vpack.c.b16 %v684, %v683
        %v700 = vpack.c.b16 %v686, %v685
        %v701 = vpack.c.b16 %v688, %v687
        %v702 = vpack.c.b16 %v690, %v689
        %v703 = vpack.c.b16 %v692, %v691
        %v704 = vpack.c.b16 %v694, %v693
        %v705 = vpack.c.b16 %v696, %v695
        %v706 = vpack.c.b16 %v698, %v697
        %715 = vmatprep.subr.bf16.mxu0 0
        %716 = vmatpush1.bf16.msra.mxu0 %v699
        %717 = vmatprep.subr.bf16.mxu0 0
        %718 = vmatpush1.bf16.msra.mxu0 %v700
        %719 = vmatprep.subr.bf16.mxu0 0
        %720 = vmatpush1.bf16.msra.mxu0 %v701
        %721 = vmatprep.subr.bf16.mxu0 0
        %722 = vmatpush1.bf16.msra.mxu0 %v702
        %723 = vmatprep.subr.bf16.mxu0 0
        %724 = vmatpush1.bf16.msra.mxu0 %v703
        %725 = vmatprep.subr.bf16.mxu0 0
        %726 = vmatpush1.bf16.msra.mxu0 %v704
        %727 = vmatprep.subr.bf16.mxu0 0
        %728 = vmatpush1.bf16.msra.mxu0 %v705
        %729 = vmatprep.subr.bf16.mxu0 0
        %730 = vmatpush1.bf16.msra.mxu0 %v706
        %731 = vmatprep.subr.bf16.mxu0 0
        %732 = vmatpush1.bf16.msra.mxu0 0
        %733 = vmatprep.subr.bf16.mxu0 0
        %734 = vmatpush1.bf16.msra.mxu0 0
        %735 = vmatprep.subr.bf16.mxu0 0
        %736 = vmatpush1.bf16.msra.mxu0 0
        %737 = vmatprep.subr.bf16.mxu0 0
        %738 = vmatpush1.bf16.msra.mxu0 0
        %739 = vmatprep.subr.bf16.mxu0 0
        %740 = vmatpush1.bf16.msra.mxu0 0
        %741 = vmatprep.subr.bf16.mxu0 0
        %742 = vmatpush1.bf16.msra.mxu0 0
        %743 = vmatprep.subr.bf16.mxu0 0
        %744 = vmatpush1.bf16.msra.mxu0 0
        %745 = vmatprep.subr.bf16.mxu0 0
        %746 = vmatpush1.bf16.msra.mxu0 0
        %747 = vmatprep.mubr.bf16.mxu0 0
        %748 = vmatmul.mubr.bf16.gmra.mrb[0].mxu0 %v660
        %v749 = vpop.f32.mrb[0].mxu0
        %v750 = vadd.f32 %v665, %v749
        %v751 = vpop.f32.mrb[0].mxu0
        %v752 = vpop.f32.mrb[0].mxu0
        %v753 = vpop.f32.mrb[0].mxu0
        %754 = vdwg.mxu0
        %v755 = vtanh.pop %v750
        %v756 = vpack.c.bf16 %v755, %v755
        %v758 = vlaneseq
        %v759 = vshrl.u32 %v758, 7
        %v760 = vsub.s32 0, %v759
        %v761 = vrot.slane %v563, %v760
        %v779 = vunpack.c.l.b16 %v545
        %v780 = vunpack.c.l.b16 %v546
        %v781 = vunpack.c.l.b16 %v547
        %v782 = vunpack.c.l.b16 %v548
        %v783 = vunpack.c.l.b16 %v549
        %v784 = vunpack.c.l.b16 %v550
        %v785 = vunpack.c.l.b16 %v551
        %v786 = vunpack.c.l.b16 %v552
        %v787 = vunpack.c.l.b16 %v553
        %v788 = vunpack.c.l.b16 %v554
        %v789 = vunpack.c.l.b16 %v555
        %v790 = vunpack.c.l.b16 %v556
        %v791 = vunpack.c.l.b16 %v557
        %v792 = vunpack.c.l.b16 %v558
        %v793 = vunpack.c.l.b16 %v559
        %v794 = vunpack.c.l.b16 %v560
        %v795 = vpack.c.b16 %v780, %v779
        %v796 = vpack.c.b16 %v782, %v781
        %v797 = vpack.c.b16 %v784, %v783
        %v798 = vpack.c.b16 %v786, %v785
        %v799 = vpack.c.b16 %v788, %v787
        %v800 = vpack.c.b16 %v790, %v789
        %v801 = vpack.c.b16 %v792, %v791
        %v802 = vpack.c.b16 %v794, %v793
        %811 = vmatprep.subr.bf16.mxu0 0
        %812 = vmatpush1.bf16.msra.mxu0 %v795
        %813 = vmatprep.subr.bf16.mxu0 0
        %814 = vmatpush1.bf16.msra.mxu0 %v796
        %815 = vmatprep.subr.bf16.mxu0 0
        %816 = vmatpush1.bf16.msra.mxu0 %v797
        %817 = vmatprep.subr.bf16.mxu0 0
        %818 = vmatpush1.bf16.msra.mxu0 %v798
        %819 = vmatprep.subr.bf16.mxu0 0
        %820 = vmatpush1.bf16.msra.mxu0 %v799
        %821 = vmatprep.subr.bf16.mxu0 0
        %822 = vmatpush1.bf16.msra.mxu0 %v800
        %823 = vmatprep.subr.bf16.mxu0 0
        %824 = vmatpush1.bf16.msra.mxu0 %v801
        %825 = vmatprep.subr.bf16.mxu0 0
        %826 = vmatpush1.bf16.msra.mxu0 %v802
        %827 = vmatprep.subr.bf16.mxu0 0
        %828 = vmatpush1.bf16.msra.mxu0 0
        %829 = vmatprep.subr.bf16.mxu0 0
        %830 = vmatpush1.bf16.msra.mxu0 0
        %831 = vmatprep.subr.bf16.mxu0 0
        %832 = vmatpush1.bf16.msra.mxu0 0
        %833 = vmatprep.subr.bf16.mxu0 0
        %834 = vmatpush1.bf16.msra.mxu0 0
        %835 = vmatprep.subr.bf16.mxu0 0
        %836 = vmatpush1.bf16.msra.mxu0 0
        %837 = vmatprep.subr.bf16.mxu0 0
        %838 = vmatpush1.bf16.msra.mxu0 0
        %839 = vmatprep.subr.bf16.mxu0 0
        %840 = vmatpush1.bf16.msra.mxu0 0
        %841 = vmatprep.subr.bf16.mxu0 0
        %842 = vmatpush1.bf16.msra.mxu0 0
        %843 = vmatprep.mubr.bf16.mxu0 0
        %844 = vmatmul.mubr.bf16.gmra.mrb[0].mxu0 %v756
        %v845 = vpop.f32.mrb[0].mxu0
        %v846 = vadd.f32 %v761, %v845
        %v847 = vpop.f32.mrb[0].mxu0
        %v848 = vpop.f32.mrb[0].mxu0
        %v849 = vpop.f32.mrb[0].mxu0
        %850 = vdwg.mxu0
        %v851 = vpack.c.bf16 %v846, %v846
        %v868 = vunpack.c.l.b16 %v529
        %v869 = vunpack.c.l.b16 %v530
        %v870 = vunpack.c.l.b16 %v531
        %v871 = vunpack.c.l.b16 %v532
        %v872 = vunpack.c.l.b16 %v533
        %v873 = vunpack.c.l.b16 %v534
        %v874 = vunpack.c.l.b16 %v535
        %v875 = vunpack.c.l.b16 %v536
        %v876 = vunpack.c.l.b16 %v537
        %v877 = vunpack.c.l.b16 %v538
        %v878 = vunpack.c.l.b16 %v539
        %v879 = vunpack.c.l.b16 %v540
        %v880 = vunpack.c.l.b16 %v541
        %v881 = vunpack.c.l.b16 %v542
        %v882 = vunpack.c.l.b16 %v543
        %v883 = vunpack.c.l.b16 %v544
        %v884 = vpack.c.b16 %v869, %v868
        %v885 = vpack.c.b16 %v871, %v870
        %v886 = vpack.c.b16 %v873, %v872
        %v887 = vpack.c.b16 %v875, %v874
        %v888 = vpack.c.b16 %v877, %v876
        %v889 = vpack.c.b16 %v879, %v878
        %v890 = vpack.c.b16 %v881, %v880
        %v891 = vpack.c.b16 %v883, %v882
        %900 = vmatprep.subr.bf16.mxu0 0
        %901 = vmatpush1.bf16.msra.mxu0 %v884
        %902 = vmatprep.subr.bf16.mxu0 0
        %903 = vmatpush1.bf16.msra.mxu0 %v885
        %904 = vmatprep.subr.bf16.mxu0 0
        %905 = vmatpush1.bf16.msra.mxu0 %v886
        %906 = vmatprep.subr.bf16.mxu0 0
        %907 = vmatpush1.bf16.msra.mxu0 %v887
        %908 = vmatprep.subr.bf16.mxu0 0
        %909 = vmatpush1.bf16.msra.mxu0 %v888
        %910 = vmatprep.subr.bf16.mxu0 0
        %911 = vmatpush1.bf16.msra.mxu0 %v889
        %912 = vmatprep.subr.bf16.mxu0 0
        %913 = vmatpush1.bf16.msra.mxu0 %v890
        %914 = vmatprep.subr.bf16.mxu0 0
        %915 = vmatpush1.bf16.msra.mxu0 %v891
        %916 = vmatprep.subr.bf16.mxu0 0
        %917 = vmatpush1.bf16.msra.mxu0 0
        %918 = vmatprep.subr.bf16.mxu0 0
        %919 = vmatpush1.bf16.msra.mxu0 0
        %920 = vmatprep.subr.bf16.mxu0 0
        %921 = vmatpush1.bf16.msra.mxu0 0
        %922 = vmatprep.subr.bf16.mxu0 0
        %923 = vmatpush1.bf16.msra.mxu0 0
        %924 = vmatprep.subr.bf16.mxu0 0
        %925 = vmatpush1.bf16.msra.mxu0 0
        %926 = vmatprep.subr.bf16.mxu0 0
        %927 = vmatpush1.bf16.msra.mxu0 0
        %928 = vmatprep.subr.bf16.mxu0 0
        %929 = vmatpush1.bf16.msra.mxu0 0
        %930 = vmatprep.subr.bf16.mxu0 0
        %931 = vmatpush1.bf16.msra.mxu0 0
        %932 = vmatprep.mubr.bf16.mxu0 0
        %933 = vmatmul.mubr.bf16.gmra.mrb[0].mxu0 %v756
        %v934 = vpop.f32.mrb[0].mxu0
        %v935 = vadd.f32 0.0, %v934
        %v936 = vpop.f32.mrb[0].mxu0
        %v937 = vpop.f32.mrb[0].mxu0
        %v938 = vpop.f32.mrb[0].mxu0
        %939 = vdwg.mxu0
        %940 = vmatprep.subr.bf16.mxu0 0
        %941 = vmatpush1.bf16.msra.mxu0 %v699
        %942 = vmatprep.subr.bf16.mxu0 0
        %943 = vmatpush1.bf16.msra.mxu0 %v700
        %944 = vmatprep.subr.bf16.mxu0 0
        %945 = vmatpush1.bf16.msra.mxu0 %v701
        %946 = vmatprep.subr.bf16.mxu0 0
        %947 = vmatpush1.bf16.msra.mxu0 %v702
        %948 = vmatprep.subr.bf16.mxu0 0
        %949 = vmatpush1.bf16.msra.mxu0 %v703
        %950 = vmatprep.subr.bf16.mxu0 0
        %951 = vmatpush1.bf16.msra.mxu0 %v704
        %952 = vmatprep.subr.bf16.mxu0 0
        %953 = vmatpush1.bf16.msra.mxu0 %v705
        %954 = vmatprep.subr.bf16.mxu0 0
        %955 = vmatpush1.bf16.msra.mxu0 %v706
        %956 = vmatprep.subr.bf16.mxu0 0
        %957 = vmatpush1.bf16.msra.mxu0 0
        %958 = vmatprep.subr.bf16.mxu0 0
        %959 = vmatpush1.bf16.msra.mxu0 0
        %960 = vmatprep.subr.bf16.mxu0 0
        %961 = vmatpush1.bf16.msra.mxu0 0
        %962 = vmatprep.subr.bf16.mxu0 0
        %963 = vmatpush1.bf16.msra.mxu0 0
        %964 = vmatprep.subr.bf16.mxu0 0
        %965 = vmatpush1.bf16.msra.mxu0 0
        %966 = vmatprep.subr.bf16.mxu0 0
        %967 = vmatpush1.bf16.msra.mxu0 0
        %968 = vmatprep.subr.bf16.mxu0 0
        %969 = vmatpush1.bf16.msra.mxu0 0
        %970 = vmatprep.subr.bf16.mxu0 0
        %971 = vmatpush1.bf16.msra.mxu0 0
        %972 = vmatprep.mubr.bf16.mxu0 0
        %973 = vmatmul.mubr.bf16.gmra.mrb[0].mxu0 %v851
        %v974 = vpop.f32.mrb[0].mxu0
        %v975 = vadd.f32 %v935, %v974
        %v976 = vpop.f32.mrb[0].mxu0
        %v977 = vpop.f32.mrb[0].mxu0
        %v978 = vpop.f32.mrb[0].mxu0
        %979 = vdwg.mxu0
        %v980 = vadd.f32 %v975, %v665
        %v981 = vtanh.pop %v980
        %v982 = vpack.c.bf16 %v981, %v981
        %983 = vmatprep.subr.bf16.mxu0 0
        %984 = vmatpush1.bf16.msra.mxu0 %v795
        %985 = vmatprep.subr.bf16.mxu0 0
        %986 = vmatpush1.bf16.msra.mxu0 %v796
        %987 = vmatprep.subr.bf16.mxu0 0
        %988 = vmatpush1.bf16.msra.mxu0 %v797
        %989 = vmatprep.subr.bf16.mxu0 0
        %990 = vmatpush1.bf16.msra.mxu0 %v798
        %991 = vmatprep.subr.bf16.mxu0 0
        %992 = vmatpush1.bf16.msra.mxu0 %v799
        %993 = vmatprep.subr.bf16.mxu0 0
        %994 = vmatpush1.bf16.msra.mxu0 %v800
        %995 = vmatprep.subr.bf16.mxu0 0
        %996 = vmatpush1.bf16.msra.mxu0 %v801
        %997 = vmatprep.subr.bf16.mxu0 0
        %998 = vmatpush1.bf16.msra.mxu0 %v802
        %999 = vmatprep.subr.bf16.mxu0 0
        %1000 = vmatpush1.bf16.msra.mxu0 0
        %1001 = vmatprep.subr.bf16.mxu0 0
        %1002 = vmatpush1.bf16.msra.mxu0 0
        %1003 = vmatprep.subr.bf16.mxu0 0
        %1004 = vmatpush1.bf16.msra.mxu0 0
        %1005 = vmatprep.subr.bf16.mxu0 0
        %1006 = vmatpush1.bf16.msra.mxu0 0
        %1007 = vmatprep.subr.bf16.mxu0 0
        %1008 = vmatpush1.bf16.msra.mxu0 0
        %1009 = vmatprep.subr.bf16.mxu0 0
        %1010 = vmatpush1.bf16.msra.mxu0 0
        %1011 = vmatprep.subr.bf16.mxu0 0
        %1012 = vmatpush1.bf16.msra.mxu0 0
        %1013 = vmatprep.subr.bf16.mxu0 0
        %1014 = vmatpush1.bf16.msra.mxu0 0
        %1015 = vmatprep.mubr.bf16.mxu0 0
        %1016 = vmatmul.mubr.bf16.gmra.mrb[0].mxu0 %v982
        %v1017 = vpop.f32.mrb[0].mxu0
        %v1018 = vadd.f32 %v761, %v1017
        %v1019 = vpop.f32.mrb[0].mxu0
        %v1020 = vpop.f32.mrb[0].mxu0
        %v1021 = vpop.f32.mrb[0].mxu0
        %1022 = vdwg.mxu0
        %v1023 = vpack.c.bf16 %v1018, %v1018
        %1024 = vmatprep.subr.bf16.mxu0 0
        %1025 = vmatpush1.bf16.msra.mxu0 %v884
        %1026 = vmatprep.subr.bf16.mxu0 0
        %1027 = vmatpush1.bf16.msra.mxu0 %v885
        %1028 = vmatprep.subr.bf16.mxu0 0
        %1029 = vmatpush1.bf16.msra.mxu0 %v886
        %1030 = vmatprep.subr.bf16.mxu0 0
        %1031 = vmatpush1.bf16.msra.mxu0 %v887
        %1032 = vmatprep.subr.bf16.mxu0 0
        %1033 = vmatpush1.bf16.msra.mxu0 %v888
        %1034 = vmatprep.subr.bf16.mxu0 0
        %1035 = vmatpush1.bf16.msra.mxu0 %v889
        %1036 = vmatprep.subr.bf16.mxu0 0
        %1037 = vmatpush1.bf16.msra.mxu0 %v890
        %1038 = vmatprep.subr.bf16.mxu0 0
        %1039 = vmatpush1.bf16.msra.mxu0 %v891
        %1040 = vmatprep.subr.bf16.mxu0 0
        %1041 = vmatpush1.bf16.msra.mxu0 0
        %1042 = vmatprep.subr.bf16.mxu0 0
        %1043 = vmatpush1.bf16.msra.mxu0 0
        %1044 = vmatprep.subr.bf16.mxu0 0
        %1045 = vmatpush1.bf16.msra.mxu0 0
        %1046 = vmatprep.subr.bf16.mxu0 0
        %1047 = vmatpush1.bf16.msra.mxu0 0
        %1048 = vmatprep.subr.bf16.mxu0 0
        %1049 = vmatpush1.bf16.msra.mxu0 0
        %1050 = vmatprep.subr.bf16.mxu0 0
        %1051 = vmatpush1.bf16.msra.mxu0 0
        %1052 = vmatprep.subr.bf16.mxu0 0
        %1053 = vmatpush1.bf16.msra.mxu0 0
        %1054 = vmatprep.subr.bf16.mxu0 0
        %1055 = vmatpush1.bf16.msra.mxu0 0
        %1056 = vmatprep.mubr.bf16.mxu0 0
        %1057 = vmatmul.mubr.bf16.gmra.mrb[0].mxu0 %v982
        %v1058 = vpop.f32.mrb[0].mxu0
        %v1059 = vadd.f32 0.0, %v1058
        %v1060 = vpop.f32.mrb[0].mxu0
        %v1061 = vpop.f32.mrb[0].mxu0
        %v1062 = vpop.f32.mrb[0].mxu0
        %1063 = vdwg.mxu0
        %1064 = vmatprep.subr.bf16.mxu0 0
        %1065 = vmatpush1.bf16.msra.mxu0 %v699
        %1066 = vmatprep.subr.bf16.mxu0 0
        %1067 = vmatpush1.bf16.msra.mxu0 %v700
        %1068 = vmatprep.subr.bf16.mxu0 0
        %1069 = vmatpush1.bf16.msra.mxu0 %v701
        %1070 = vmatprep.subr.bf16.mxu0 0
        %1071 = vmatpush1.bf16.msra.mxu0 %v702
        %1072 = vmatprep.subr.bf16.mxu0 0
        %1073 = vmatpush1.bf16.msra.mxu0 %v703
        %1074 = vmatprep.subr.bf16.mxu0 0
        %1075 = vmatpush1.bf16.msra.mxu0 %v704
        %1076 = vmatprep.subr.bf16.mxu0 0
        %1077 = vmatpush1.bf16.msra.mxu0 %v705
        %1078 = vmatprep.subr.bf16.mxu0 0
        %1079 = vmatpush1.bf16.msra.mxu0 %v706
        %1080 = vmatprep.subr.bf16.mxu0 0
        %1081 = vmatpush1.bf16.msra.mxu0 0
        %1082 = vmatprep.subr.bf16.mxu0 0
        %1083 = vmatpush1.bf16.msra.mxu0 0
        %1084 = vmatprep.subr.bf16.mxu0 0
        %1085 = vmatpush1.bf16.msra.mxu0 0
        %1086 = vmatprep.subr.bf16.mxu0 0
        %1087 = vmatpush1.bf16.msra.mxu0 0
        %1088 = vmatprep.subr.bf16.mxu0 0
        %1089 = vmatpush1.bf16.msra.mxu0 0
        %1090 = vmatprep.subr.bf16.mxu0 0
        %1091 = vmatpush1.bf16.msra.mxu0 0
        %1092 = vmatprep.subr.bf16.mxu0 0
        %1093 = vmatpush1.bf16.msra.mxu0 0
        %1094 = vmatprep.subr.bf16.mxu0 0
        %1095 = vmatpush1.bf16.msra.mxu0 0
        %1096 = vmatprep.mubr.bf16.mxu0 0
        %1097 = vmatmul.mubr.bf16.gmra.mrb[0].mxu0 %v1023
        %v1098 = vpop.f32.mrb[0].mxu0
        %v1099 = vadd.f32 %v1059, %v1098
        %v1100 = vpop.f32.mrb[0].mxu0
        %v1101 = vpop.f32.mrb[0].mxu0
        %v1102 = vpop.f32.mrb[0].mxu0
        %1103 = vdwg.mxu0
        %v1104 = vadd.f32 %v1099, %v665
        %v1105 = vtanh.pop %v1104
        %v1106 = vpack.c.bf16 %v1105, %v1105
        %1107 = vmatprep.subr.bf16.mxu0 0
        %1108 = vmatpush1.bf16.msra.mxu0 %v795
        %1109 = vmatprep.subr.bf16.mxu0 0
        %1110 = vmatpush1.bf16.msra.mxu0 %v796
        %1111 = vmatprep.subr.bf16.mxu0 0
        %1112 = vmatpush1.bf16.msra.mxu0 %v797
        %1113 = vmatprep.subr.bf16.mxu0 0
        %1114 = vmatpush1.bf16.msra.mxu0 %v798
        %1115 = vmatprep.subr.bf16.mxu0 0
        %1116 = vmatpush1.bf16.msra.mxu0 %v799
        %1117 = vmatprep.subr.bf16.mxu0 0
        %1118 = vmatpush1.bf16.msra.mxu0 %v800
        %1119 = vmatprep.subr.bf16.mxu0 0
        %1120 = vmatpush1.bf16.msra.mxu0 %v801
        %1121 = vmatprep.subr.bf16.mxu0 0
        %1122 = vmatpush1.bf16.msra.mxu0 %v802
        %1123 = vmatprep.subr.bf16.mxu0 0
        %1124 = vmatpush1.bf16.msra.mxu0 0
        %1125 = vmatprep.subr.bf16.mxu0 0
        %1126 = vmatpush1.bf16.msra.mxu0 0
        %1127 = vmatprep.subr.bf16.mxu0 0
        %1128 = vmatpush1.bf16.msra.mxu0 0
        %1129 = vmatprep.subr.bf16.mxu0 0
        %1130 = vmatpush1.bf16.msra.mxu0 0
        %1131 = vmatprep.subr.bf16.mxu0 0
        %1132 = vmatpush1.bf16.msra.mxu0 0
        %1133 = vmatprep.subr.bf16.mxu0 0
        %1134 = vmatpush1.bf16.msra.mxu0 0
        %1135 = vmatprep.subr.bf16.mxu0 0
        %1136 = vmatpush1.bf16.msra.mxu0 0
        %1137 = vmatprep.subr.bf16.mxu0 0
        %1138 = vmatpush1.bf16.msra.mxu0 0
        %1139 = vmatprep.mubr.bf16.mxu0 0
        %1140 = vmatmul.mubr.bf16.gmra.mrb[0].mxu0 %v1106
        %v1141 = vpop.f32.mrb[0].mxu0
        %v1142 = vadd.f32 %v761, %v1141
        %v1143 = vpop.f32.mrb[0].mxu0
        %v1144 = vpop.f32.mrb[0].mxu0
        %v1145 = vpop.f32.mrb[0].mxu0
        %1146 = vdwg.mxu0
        %1147 = vadd.xlane.f32.xlu0 %v1142
        %v1148 = vpop.xlane.xlu0 %1147
        %v1149 = vrcp.pop 128.0
        %v1150 = vmul.f32 %v1148, %v1149
        %v1151 = vsub.f32 %v1142, %v1150
        %v1152 = vmul.f32 %v1151, %v1151
        %1153 = vadd.xlane.f32.xlu0 %v1152
        %v1154 = vpop.xlane.xlu0 %1153
        %v1155 = vmul.f32 %v1154, %v1149
        %v1156 = vadd.f32 %v1155, 1e-12
        %v1157 = vrsqrt.pop %v1156
        %v1158 = vmul.f32 %v1151, %v1157
        %v1159 = vld [vmem:[#allocation16] sm:$0x1]
        %v1161 = vlaneseq
        %v1162 = vshrl.u32 %v1161, 7
        %v1163 = vsub.s32 0, %v1162
        %v1164 = vrot.slane %v1159, %v1163
        %v1166 = vmul.f32 %v1158, %v1164
        %v1167 = vld [vmem:[#allocation17] sm:$0x1]
        %v1169 = vlaneseq
        %v1170 = vshrl.u32 %v1169, 7
        %v1171 = vsub.s32 0, %v1170
        %v1172 = vrot.slane %v1167, %v1171
        %v1174 = vadd.f32 %v1166, %v1172
        %1175 = vst [vmem:[%s495] sm:$0xff] %v1174
        %s1176 = sand.u32 %s255, 1
        %s1177 = scalar_lea.sflag [#allocation4], %s1176
        %s1178 = sand.u32 %s255, 1
        %s1179 = smul.addr %s1178, 8
        %s1180 = scalar_lea.vmem [#allocation19], %s1179
        // Predicated region
        $region101: #{tpu_custom_call.1} parent=59 // pred_check
          %p1181 = pneg %p265
        $region102: #{tpu_custom_call.1} parent=59 // pred_check_branch
          %1183 = sbr.rel (%p1181) target = $region104
        $region103: #{tpu_custom_call.1} parent=59 // pred_region
          %s1185 = ssub.s32 128, 128
          %1186 = vsyncadd %s1177, %s1185
          %s1187 = smul.addr %s32, 128
          %s1188 = scalar_lea.hbm %s10, %s1187
          %s1190 = sshll.u32 %s1180, 4
          %s1191 = int_to_ptr.vmem [resolvable:$true] %s1190
          %1193 = dma.vmem_to_hbm [thread:$0]  %s1191, 128, %s1188, %s1177
        $region104: #{tpu_custom_call.1} parent=59 // pred_fallthru
          _
      $region60: #{tpu_custom_call.1} parent=5 // pred_fallthru
        _
      %p1194 = scmp.le.s32.totalorder 2, %s27
      // Predicated region
      $region105: #{tpu_custom_call.1} parent=5 // pred_check
        %p1195 = pneg %p1194
      $region106: #{tpu_custom_call.1} parent=5 // pred_check_branch
        %1197 = sbr.rel (%p1195) target = $region108
      $region107: #{tpu_custom_call.1} parent=5 // pred_region
        %s1198 = ssub.s32 %s27, 2
        // Predicated region
        $region109: #{tpu_custom_call.1} parent=107 // pred_check
          %p1199 = pneg %p271
        $region110: #{tpu_custom_call.1} parent=107 // pred_check_branch
          %1201 = sbr.rel (%p1199) target = $region112
        $region111: #{tpu_custom_call.1} parent=107 // pred_region
          %s1202 = sand.u32 %s256, 1
          %s1203 = scalar_lea.sflag [#allocation4], %s1202
          %s1204 = sand.u32 %s256, 1
          %s1205 = smul.addr %s1204, 8
          %s1206 = scalar_lea.vmem [#allocation19], %s1205
          %1207 = dma.done %s1203, 128
        $region112: #{tpu_custom_call.1} parent=107 // pred_fallthru
          _
      $region108: #{tpu_custom_call.1} parent=5 // pred_fallthru
        _
    $region6: #{tpu_custom_call.1} parent=1 // loop_footer
      %s31 = sadd.s32 1, %s27
    $region7: #{tpu_custom_call.1} parent=1 // loop_footer_branch
      %26 = sbr.rel target = $region3
    $region8: #{tpu_custom_call.1} parent=1 // loop_exit
      _
    %1208 = vsyncpa [#allocation3], 1
    %s1209 = scalar_lea.sflag [#allocation3], 1
    %1210 = vsyncpa %s1209, 1
    %1211 = vsyncpa [#allocation6], 1
    %1212 = vsyncpa [#allocation9], 1
    %1213 = vsyncpa [#allocation12], 1
    %1214 = vsyncpa [#allocation15], 1
    %1215 = vsyncpa [#allocation18], 1
    %1216 = vsyncpa [#allocation4], 1
    %s1217 = scalar_lea.sflag [#allocation4], 1
    %1218 = vsyncpa %s1217, 1

</llo_original>
